<compile_context>
chip_gen: v7x
topology: tpu7x:2x2x1
jax: 0.10.0
libtpu: 0.0.40
codegen_flags: <defaults>
</compile_context>

<pallas_src>
import jax
import jax.numpy as jnp
from jax.experimental import pallas as pl
from jax.experimental.pallas import tpu as pltpu


# ---------------------------------------------------------------------------
# Generation-aware VMEM budgets (v7x: 64 MiB per TensorCore, v5e/v6e: 128 MiB)
# ---------------------------------------------------------------------------
def _query_vmem_capacity():
    try:
        return int(pltpu.get_tpu_info().vmem_capacity_bytes)
    except Exception:
        return 64 << 20          # conservative fallback: v7x per-core VMEM


_VMEM_CAP = _query_vmem_capacity()
# Largest scoped-VMEM limit we will ever request (v7x -> 32 MiB, v5e/v6e ->
# 64 MiB), leaving headroom for compiler scratch / weight double-buffers.
_SCOPED_CAP = int(max(16 << 20, min(_VMEM_CAP // 2, 64 << 20)))
# Largest raw (C, H*W) image (bytes) that still takes the single-HBM-read
# fused path (true need ~= 2x in + 2x out double-buffered blocks + slack).
_FUSE_RAW_LIMIT = max(1 << 20, (_SCOPED_CAP - (2 << 20)) // 4)


def _vmem_limit(need_bytes, headroom=2 << 20):
    """Explicit scoped-VMEM limit from an explicit (double-buffer inclusive)
    byte estimate, clamped to the generation-aware budget."""
    return int(min(max(int(need_bytes) + headroom, 8 << 20), _SCOPED_CAP))


def _default_max_hw_tile(C, itemsize, buffers):
    """Largest lane-aligned spatial tile whose `buffers` (C, tile) blocks fit
    in roughly half of the scoped-VMEM budget."""
    t = (_SCOPED_CAP // 2) // max(1, buffers * C * itemsize)
    return int(min(max(128, (t // 128) * 128), 8192))


def _pick_hw_tile(hw, max_tile):
    """Spatial chunk size.  Prefers lane-aligned (multiple-of-128) tiles that
    divide hw exactly; if none exists, returns a lane-aligned tile anyway and
    the kernels mask / partially write the last chunk (cdiv grid)."""
    max_tile = max(128, int(max_tile))
    if hw <= max_tile:
        return hw
    t0 = max_tile - max_tile % 128
    for t in range(t0, 127, -128):
        if hw % t == 0:
            return t
    return t0                     # no exact 128-multiple divisor -> masked tail


def _transposed_mlp_params(params):
    """Weights in (out, in) column orientation so the MLP runs in the natural
    (C, .) sublane layout (no relayouts inside the kernels)."""
    w1t = params["w1"].T                       # (hidden, C)
    b1t = params["b1"].reshape(-1, 1)          # (hidden, 1)
    w2t = params["w2"].T                       # (out_dim, hidden)
    b2t = params["b2"].reshape(-1, 1)          # (out_dim, 1)
    return w1t, b1t, w2t, b2t


def _weights_bytes(*arrs):
    return sum(int(a.size) * a.dtype.itemsize for a in arrs)


# ---------------------------------------------------------------------------
# In-kernel pooling / MLP helpers
# ---------------------------------------------------------------------------
def _pooled_stats(x_ref, hw):
    """f32 per-channel (sum, max) columns of shape (C, 1) from a (1, C, hw)
    VMEM ref block.  Accumulates 128-lane slices elementwise on the VPU
    (upcasting one slice at a time -> no full-size f32 temp); the cross-lane
    reduce runs once at the end."""
    n_full = hw // 128
    tail = hw - n_full * 128
    sums, maxs = [], []
    if n_full > 0:
        s = x_ref[0, :, 0:128].astype(jnp.float32)
        m = s
        for t in range(1, n_full):
            blk = x_ref[0, :, t * 128:(t + 1) * 128].astype(jnp.float32)
            s = s + blk
            m = jnp.maximum(m, blk)
        sums.append(jnp.sum(s, axis=1, keepdims=True))
        maxs.append(jnp.max(m, axis=1, keepdims=True))
    if tail > 0:
        blk = x_ref[0, :, n_full * 128:hw].astype(jnp.float32)
        sums.append(jnp.sum(blk, axis=1, keepdims=True))
        maxs.append(jnp.max(blk, axis=1, keepdims=True))
    s_col, m_col = sums[0], maxs[0]
    for s_, m_ in zip(sums[1:], maxs[1:]):
        s_col = s_col + s_
        m_col = jnp.maximum(m_col, m_)
    return s_col, m_col


def _mlp_logits(avg, mxp, w1t_ref, b1t_ref, w2t_ref, b2t_ref):
    """logits of mlp(avg)+mlp(max) in column layout.
    avg/mxp: (C, 1) f32 columns -> (out_dim, 1) logits.
    W1 is pushed to the MXU once, on a stacked (C, 2) right-hand side."""
    C = avg.shape[0]
    lane2 = jax.lax.broadcasted_iota(jnp.int32, (C, 2), 1)
    pooled = jnp.where(lane2 == 0, avg, mxp)                     # (C, 2) [avg|max]
    h = jnp.maximum(
        jnp.dot(w1t_ref[...], pooled, preferred_element_type=jnp.float32)
        + b1t_ref[...], 0.0)                                     # (hidden, 2)
    hsum = jnp.sum(h, axis=1, keepdims=True)                     # h_avg + h_max
    # == mlp(avg)+mlp(max); b2 intentionally counted twice (matches reference).
    return (jnp.dot(w2t_ref[...], hsum, preferred_element_type=jnp.float32)
            + 2.0 * b2t_ref[...])                                # (out_dim, 1)


# ---------------------------------------------------------------------------
# Kernel 1 (depth_scales == 1 hot path): fused pool + MLP + sigmoid + scale.
# Single read of x from HBM.  No full-size f32 temp.
# ---------------------------------------------------------------------------
def _fused_gate_kernel(x_ref, w1t_ref, b1t_ref, w2t_ref, b2t_ref,
                       o_ref, attn_ref):
    _, C, HW = x_ref.shape
    s_col, m_col = _pooled_stats(x_ref, HW)                      # f32 (C, 1)
    avg = s_col * (1.0 / float(HW))
    attn = jax.nn.sigmoid(
        _mlp_logits(avg, m_col, w1t_ref, b1t_ref, w2t_ref, b2t_ref))  # (C, 1)
    attn_ref[...] = attn[None]                                   # (1, C, 1)
    # Per-channel scale in the input's native dtype (attn is tiny; cast it).
    o_ref[...] = (x_ref[...] * attn.astype(o_ref.dtype)[None]).astype(o_ref.dtype)


def fused_channel_gate(x3, params):
    """depth_scales == 1: returns (x * sigmoid(attn), attn_col)."""
    N, C, HW = x3.shape
    w1t, b1t, w2t, b2t = _transposed_mlp_params(params)
    need = (4 * C * HW * x3.dtype.itemsize            # 2x in + 2x out blocks
            + 2 * _weights_bytes(w1t, b1t, w2t, b2t)
            + 6 * C * 128 * 4                         # f32 slice accumulators
            + 4 * C * 4)                              # attn blocks
    out, attn_col = pl.pallas_call(
        _fused_gate_kernel,
        out_shape=(jax.ShapeDtypeStruct((N, C, HW), x3.dtype),
                   jax.ShapeDtypeStruct((N, C, 1), jnp.float32)),
        grid_spec=pltpu.PrefetchScalarGridSpec(
            num_scalar_prefetch=0,
            grid=(N,),
            in_specs=[
                pl.BlockSpec((1, C, HW), lambda n: (n, 0, 0)),
                pl.BlockSpec(w1t.shape, lambda n: (0, 0)),
                pl.BlockSpec(b1t.shape, lambda n: (0, 0)),
                pl.BlockSpec(w2t.shape, lambda n: (0, 0)),
                pl.BlockSpec(b2t.shape, lambda n: (0, 0)),
            ],
            out_specs=[
                pl.BlockSpec((1, C, HW), lambda n: (n, 0, 0)),
                pl.BlockSpec((1, C, 1), lambda n: (n, 0, 0)),
            ],
        ),
        compiler_params=pltpu.CompilerParams(
            dimension_semantics=("parallel",),
            vmem_limit_bytes=_vmem_limit(need),
        ),
    )(x3, w1t, b1t, w2t, b2t)
    return out, attn_col


# ---------------------------------------------------------------------------
# Kernel 2: spatially-chunked channel attention (pool + MLP + sigmoid).
# Lane-parallel (C, 128) running stats in VMEM scratch; masked last chunk for
# ragged spatial sizes.  Used for depth_scales > 1 and as the large-image
# fallback for depth_scales == 1.
# ---------------------------------------------------------------------------
def channel_attention(x3, params, *, max_hw_tile=None):
    N, C, HW = x3.shape
    w1t, b1t, w2t, b2t = _transposed_mlp_params(params)
    out_dim = w2t.shape[0]
    itemsize = x3.dtype.itemsize
    if max_hw_tile is None:
        max_hw_tile = _default_max_hw_tile(C, itemsize, buffers=3)
    hw_tile = _pick_hw_tile(HW, max_hw_tile)
    n_chunks = pl.cdiv(HW, hw_tile)
    exact = (HW % hw_tile) == 0
    lane_acc = (hw_tile % 128) == 0            # lane-parallel running stats
    acc_l = 128 if lane_acc else 1
    inv_hw = 1.0 / float(HW)

    def kernel(x_ref, w1t_ref, b1t_ref, w2t_ref, b2t_ref,
               attn_ref, sum_sc, max_sc):
        c_idx = pl.program_id(1)

        @pl.when(c_idx == 0)
        def _init():
            sum_sc[...] = jnp.zeros_like(sum_sc)
            max_sc[...] = jnp.full_like(max_sc, -jnp.inf)

        if lane_acc:
            n_sl = hw_tile // 128
            if exact:
                s = x_ref[0, :, 0:128].astype(jnp.float32)
                m = s
                for t in range(1, n_sl):
                    blk = x_ref[0, :, t * 128:(t + 1) * 128].astype(jnp.float32)
                    s = s + blk
                    m = jnp.maximum(m, blk)
            else:
                # last chunk extends past HW: mask padded lanes per slice.
                lane = jax.lax.broadcasted_iota(jnp.int32, (C, 128), 1)
                start = c_idx * hw_tile
                s = jnp.zeros((C, 128), jnp.float32)
                m = jnp.full((C, 128), -jnp.inf, jnp.float32)
                for t in range(n_sl):
                    blk = x_ref[0, :, t * 128:(t + 1) * 128].astype(jnp.float32)
                    valid = (start + t * 128 + lane) < HW
                    s = s + jnp.where(valid, blk, 0.0)
                    m = jnp.maximum(m, jnp.where(valid, blk, -jnp.inf))
            sum_sc[...] += s
            max_sc[...] = jnp.maximum(max_sc[...], m)
        else:
            # hw_tile == HW (single, non-lane-aligned chunk): reduce in-chunk.
            s_col, m_col = _pooled_stats(x_ref, hw_tile)
            sum_sc[...] += s_col
            max_sc[...] = jnp.maximum(max_sc[...], m_col)

        @pl.when(c_idx == n_chunks - 1)
        def _finalize():
            avg = jnp.sum(sum_sc[...], axis=1, keepdims=True) * inv_hw   # (C,1)
            mxp = jnp.max(max_sc[...], axis=1, keepdims=True)            # (C,1)
            logits = _mlp_logits(avg, mxp, w1t_ref, b1t_ref, w2t_ref, b2t_ref)
            attn_ref[...] = jax.nn.sigmoid(logits)[None]        # (1, out_dim, 1)

    need = (2 * C * hw_tile * itemsize                 # double-buffered input
            + 2 * C * acc_l * 4                        # running-stat scratch
            + 6 * C * 128 * 4                          # f32 working slices
            + 2 * _weights_bytes(w1t, b1t, w2t, b2t))
    return pl.pallas_call(
        kernel,
        out_shape=jax.ShapeDtypeStruct((N, out_dim, 1), jnp.float32),
        grid_spec=pltpu.PrefetchScalarGridSpec(
            num_scalar_prefetch=0,
            grid=(N, n_chunks),
            in_specs=[
                pl.BlockSpec((1, C, hw_tile), lambda n, c: (n, 0, c)),
                pl.BlockSpec(w1t.shape, lambda n, c: (0, 0)),
                pl.BlockSpec(b1t.shape, lambda n, c: (0, 0)),
                pl.BlockSpec(w2t.shape, lambda n, c: (0, 0)),
                pl.BlockSpec(b2t.shape, lambda n, c: (0, 0)),
            ],
            out_specs=pl.BlockSpec((1, out_dim, 1), lambda n, c: (n, 0, 0)),
            scratch_shapes=[pltpu.VMEM((C, acc_l), jnp.float32),
                            pltpu.VMEM((C, acc_l), jnp.float32)],
        ),
        compiler_params=pltpu.CompilerParams(
            # chunk axis is a real reduction -> keep it 'arbitrary'
            dimension_semantics=("parallel", "arbitrary"),
            vmem_limit_bytes=_vmem_limit(need),
        ),
    )(x3, w1t, b1t, w2t, b2t)


# ---------------------------------------------------------------------------
# Kernel 3: per-channel scaling (depth_scales == 1 large-image fallback).
# ---------------------------------------------------------------------------
def _scale_kernel(x_ref, attn_ref, o_ref):
    # Multiply in the input's native dtype (cast the tiny attn, not the image).
    o_ref[...] = x_ref[...] * attn_ref[...].astype(o_ref.dtype)


def apply_channel_scale(x3, attn_col, *, max_hw_tile=None):
    N, C, HW = x3.shape
    itemsize = x3.dtype.itemsize
    if max_hw_tile is None:
        max_hw_tile = _default_max_hw_tile(C, itemsize, buffers=4)
    hw_tile = _pick_hw_tile(HW, max_hw_tile)
    n_chunks = pl.cdiv(HW, hw_tile)
    need = 4 * C * hw_tile * itemsize + 4 * C * 4
    return pl.pallas_call(
        _scale_kernel,
        out_shape=jax.ShapeDtypeStruct((N, C, HW), x3.dtype),
        grid_spec=pltpu.PrefetchScalarGridSpec(
            num_scalar_prefetch=0,
            grid=(N, n_chunks),
            in_specs=[
                pl.BlockSpec((1, C, hw_tile), lambda n, c: (n, 0, c)),
                pl.BlockSpec((1, C, 1), lambda n, c: (n, 0, 0)),
            ],
            out_specs=pl.BlockSpec((1, C, hw_tile), lambda n, c: (n, 0, c)),
        ),
        compiler_params=pltpu.CompilerParams(
            # both axes independent -> v7x can shard across its 2 TensorCores
            dimension_semantics=("parallel", "parallel"),
            vmem_limit_bytes=_vmem_limit(need),
        ),
    )(x3, attn_col)


# ---------------------------------------------------------------------------
# Kernel 4: data-dependent channel gather (depth_scales > 1).
# x stays in HBM (memory_space=pl.ANY); G gather DMAs per grid step land
# directly in the pipelined VMEM output block (no staging copy).
# ---------------------------------------------------------------------------
def _pick_gather_group(c_out, hw, itemsize, max_g):
    """Channels gathered per grid step: largest sublane-aligned divisor of
    c_out whose double-buffered output block fits the VMEM budget."""
    cap = (_SCOPED_CAP // 2) // max(1, 2 * hw * itemsize)
    cap = max(1, min(int(max_g), int(cap)))
    best = 0
    for d in range(8, min(cap, c_out) + 1, 8):
        if c_out % d == 0:
            best = d
    if best == 0:
        # Awkward c_out (not a multiple of 8 / no divisor fits the budget):
        # fall back to the full channel dim, which is always layout-legal.
        best = c_out
    return best


def gather_channels(x3, flat_idx, *, max_channels_per_step=64):
    """out[n, c, :] = x3[n, flat_idx[n, c], :]"""
    N, C, HW = x3.shape
    c_out = flat_idx.shape[1]
    itemsize = x3.dtype.itemsize
    G = _pick_gather_group(c_out, HW, itemsize, max_channels_per_step)

    def kernel(idx_ref, x_hbm, o_ref, sems):
        n = pl.program_id(0)
        base = pl.program_id(1) * G
        copies = []
        for g in range(G):                      # static unroll: G DMAs in flight
            src = idx_ref[n, base + g]
            cp = pltpu.make_async_copy(x_hbm.at[n, src], o_ref.at[0, g],
                                       sems.at[g])
            cp.start()
            copies.append(cp)
        for cp in copies:
            cp.wait()
        # Output block is written back by the pipeline; no VMEM staging copy.

    need = 2 * G * HW * itemsize + 4096
    return pl.pallas_call(
        kernel,
        out_shape=jax.ShapeDtypeStruct((N, c_out, HW), x3.dtype),
        grid_spec=pltpu.PrefetchScalarGridSpec(
            num_scalar_prefetch=1,
            grid=(N, c_out // G),
            in_specs=[pl.BlockSpec(memory_space=pl.ANY)],      # x stays in HBM
            out_specs=pl.BlockSpec((1, G, HW), lambda n, cb, idx: (n, cb, 0)),
            scratch_shapes=[pltpu.SemaphoreType.DMA((G,))],
        ),
        compiler_params=pltpu.CompilerParams(
            # both axes independent -> v7x megacore sharding
            dimension_semantics=("parallel", "parallel"),
            vmem_limit_bytes=_vmem_limit(need),
        ),
    )(flat_idx, x3)


# ---------------------------------------------------------------------------
# Parameter init (deterministic, synthetic) and full forward
# ---------------------------------------------------------------------------
def init_params(input_dim, depth_scales, reduction_ratio, key):
    hidden = max(1, input_dim // reduction_ratio)
    out_dim = input_dim * depth_scales
    k1, k2, k3, k4 = jax.random.split(key, 4)
    return {
        "w1": 0.2 * jax.random.normal(k1, (input_dim, hidden), jnp.float32),
        "b1": 0.1 * jax.random.normal(k2, (1, hidden), jnp.float32),
        "w2": 0.2 * jax.random.normal(k3, (hidden, out_dim), jnp.float32),
        "b2": 0.1 * jax.random.normal(k4, (1, out_dim), jnp.float32),
    }


def cutoff_module_forward(x, params, depth_scales, *, max_hw_tile=None,
                          force_unfused=False):
    """Pallas implementation of CutoffModule.forward.
    Returns (out_feat, attn); the PyTorch module returns out_feat only (attn is
    provided additionally for inspection/verification)."""
    N, C, H, W = x.shape
    HW = H * W
    x3 = x.reshape(N, C, HW)        # lane-dense layout: H*W on the lane axis

    if depth_scales == 1:
        raw_bytes = C * HW * x.dtype.itemsize
        if not force_unfused and raw_bytes <= _FUSE_RAW_LIMIT:
            out3, attn_col = fused_channel_gate(x3, params)       # 1 read of x
        else:
            attn_col = channel_attention(x3, params, max_hw_tile=max_hw_tile)
            out3 = apply_channel_scale(x3, attn_col, max_hw_tile=max_hw_tile)
        return out3.reshape(N, C, H, W), attn_col.reshape(N, 1, C)

    attn_col = channel_attention(x3, params, max_hw_tile=max_hw_tile)  # (N,C*D,1)
    attn = attn_col.reshape(N, 1, C * depth_scales)

    block_size = C // depth_scales
    attn3 = attn_col.reshape(N, C, depth_scales)                       # (N, C, D)
    # top-k over the channel axis, independently per depth scale.
    # TODO(synk): top-k is a sort with no clean Pallas equivalent; it stays in JAX.
    _, idx = jax.lax.top_k(jnp.transpose(attn3, (0, 2, 1)), block_size)  # (N,D,bs)
    flat_idx = idx.reshape(N, depth_scales * block_size).astype(jnp.int32)
    out3 = gather_channels(x3, flat_idx)
    return out3.reshape(N, -1, H, W), attn


# ---------------------------------------------------------------------------
# Pure-JAX reference (mirrors PyTorch semantics) for verification
# ---------------------------------------------------------------------------
def ref_channel_attention(x, params):
    avg = x.mean(axis=(2, 3))
    mxp = x.max(axis=(2, 3))
    hp = jax.lax.Precision.HIGHEST

    def mlp(p):
        h = jnp.maximum(jnp.dot(p, params["w1"], precision=hp) + params["b1"], 0.0)
        return jnp.dot(h, params["w2"], precision=hp) + params["b2"]

    return jax.nn.sigmoid(mlp(avg) + mlp(mxp))                  # (N, C*D)


if __name__ == "__main__":
    key = jax.random.PRNGKey(0)
    kx, kx2, kp1, kp2 = jax.random.split(key, 4)

    N, C, H, W = 2, 16, 16, 16
    x = jax.random.normal(kx, (N, C, H, W), jnp.float32)

    # -------- depth_scales > 1 path (ExpandedChannelGate + top-k cutoff) -----
    D = 2
    block_size = C // D
    params_d = init_params(C, D, reduction_ratio=4, key=kp1)
    out_d, attn_d = cutoff_module_forward(x, params_d, D)
    jax.block_until_ready(out_d)

    attn_ref = ref_channel_attention(x, params_d)               # (N, C*D)
    assert bool(jnp.allclose(attn_d.reshape(N, C * D), attn_ref,
                             atol=2e-3, rtol=2e-3)), "attention mismatch"

    _, idx = jax.lax.top_k(
        jnp.transpose(attn_d.reshape(N, C, D), (0, 2, 1)), block_size)
    flat = idx.reshape(N, C)
    ref_gather = jnp.take_along_axis(x, flat[:, :, None, None], axis=1)
    assert bool(jnp.array_equal(out_d, ref_gather)), "gather mismatch"

    # -------- depth_scales == 1 path, fused single-read ChannelGate ----------
    params_1 = init_params(C, 1, reduction_ratio=4, key=kp2)
    out_1, attn_1 = cutoff_module_forward(x, params_1, 1)
    jax.block_until_ready(out_1)

    ref_out1 = x * ref_channel_attention(x, params_1)[:, :, None, None]
    assert bool(jnp.allclose(out_1, ref_out1, atol=2e-3, rtol=2e-3)), \
        "fused channel-gate mismatch"

    # -------- depth_scales == 1, chunked fallback (spatial tiling) -----------
    out_1b, _ = cutoff_module_forward(x, params_1, 1, force_unfused=True,
                                      max_hw_tile=128)
    jax.block_until_ready(out_1b)
    assert bool(jnp.allclose(out_1b, ref_out1, atol=2e-3, rtol=2e-3)), \
        "chunked channel-gate mismatch"

    # -------- non-128-divisible spatial size (masked last chunk) -------------
    H2, W2 = 10, 30                                  # H*W = 300 (not /128)
    x2 = jax.random.normal(kx2, (N, C, H2, W2), jnp.float32)
    ref_out2 = x2 * ref_channel_attention(x2, params_1)[:, :, None, None]

    out_2a, _ = cutoff_module_forward(x2, params_1, 1)           # fused, tail slice
    out_2b, _ = cutoff_module_forward(x2, params_1, 1, force_unfused=True,
                                      max_hw_tile=128)           # masked chunks
    jax.block_until_ready(out_2b)
    assert bool(jnp.allclose(out_2a, ref_out2, atol=2e-3, rtol=2e-3)), \
        "fused gate (ragged spatial) mismatch"
    assert bool(jnp.allclose(out_2b, ref_out2, atol=2e-3, rtol=2e-3)), \
        "masked chunked gate mismatch"

    print("KERNEL_OK")
</pallas_src>

<mosaic_0001>
module attributes {stable_mosaic.version = 11 : i64} {
  func.func @kernel(%arg0: i32, %arg1: i32, %arg2: memref<1x16x256xf32, #tpu.memory_space<vmem>>, %arg3: memref<4x16xf32, #tpu.memory_space<vmem>>, %arg4: memref<4x1xf32, #tpu.memory_space<vmem>>, %arg5: memref<32x4xf32, #tpu.memory_space<vmem>>, %arg6: memref<32x1xf32, #tpu.memory_space<vmem>>, %arg7: memref<1x32x1xf32, #tpu.memory_space<vmem>>, %arg8: memref<16x128xf32, #tpu.memory_space<vmem>>, %arg9: memref<16x128xf32, #tpu.memory_space<vmem>>) attributes {dimension_semantics = [#tpu.dimension_semantics<parallel>, #tpu.dimension_semantics<arbitrary>], iteration_bounds = array<i64: 2, 1>, scalar_prefetch = 0 : i64, scratch_operands = 2 : i64, tpu.core_type = #tpu.core_type<tc>, window_params = [{transform_indices = @transform_0, window_bounds = array<i64: 1, 16, 256>}, {pipeline_mode = #tpu.pipeline_mode<synchronous>, transform_indices = @transform_1, window_bounds = array<i64: 4, 16>}, {pipeline_mode = #tpu.pipeline_mode<synchronous>, transform_indices = @transform_2, window_bounds = array<i64: 4, 1>}, {pipeline_mode = #tpu.pipeline_mode<synchronous>, transform_indices = @transform_3, window_bounds = array<i64: 32, 4>}, {pipeline_mode = #tpu.pipeline_mode<synchronous>, transform_indices = @transform_4, window_bounds = array<i64: 32, 1>}, {transform_indices = @transform_5, window_bounds = array<i64: 1, 32, 1>}]} {
    %c0_i32 = arith.constant 0 : i32
    %0 = arith.cmpi eq, %arg1, %c0_i32 : i32
    %1 = arith.extui %0 : i1 to i32
    %c0_i32_0 = arith.constant 0 : i32
    %2 = arith.cmpi ne, %1, %c0_i32_0 : i32
    scf.if %2 {
      %cst = arith.constant 0.000000e+00 : f32
      %18 = vector.broadcast %cst : f32 to vector<16x128xf32>
      %c0_15 = arith.constant 0 : index
      %c0_16 = arith.constant 0 : index
      %19 = vector.load %arg8[%c0_15, %c0_16] : memref<16x128xf32, #tpu.memory_space<vmem>>, vector<16x128xf32>
      tpu.vector_store %arg8[%c0_15, %c0_16], %18 {strides = array<i32>} : memref<16x128xf32, #tpu.memory_space<vmem>>, vector<16x128xf32>,
      %cst_17 = arith.constant 0xFF800000 : f32
      %20 = vector.broadcast %cst_17 : f32 to vector<16x128xf32>
      %c0_18 = arith.constant 0 : index
      %c0_19 = arith.constant 0 : index
      %21 = vector.load %arg9[%c0_18, %c0_19] : memref<16x128xf32, #tpu.memory_space<vmem>>, vector<16x128xf32>
      tpu.vector_store %arg9[%c0_18, %c0_19], %20 {strides = array<i32>} : memref<16x128xf32, #tpu.memory_space<vmem>>, vector<16x128xf32>,
    } else {
    }
    %c0 = arith.constant 0 : index
    %c0_1 = arith.constant 0 : index
    %c0_2 = arith.constant 0 : index
    %3 = vector.load %arg2[%c0, %c0_1, %c0_2] : memref<1x16x256xf32, #tpu.memory_space<vmem>>, vector<1x16x128xf32>
    %4 = vector.shape_cast %3 : vector<1x16x128xf32> to vector<16x128xf32>
    %c0_3 = arith.constant 0 : index
    %c0_4 = arith.constant 0 : index
    %c128 = arith.constant 128 : index
    %5 = vector.load %arg2[%c0_3, %c0_4, %c128] : memref<1x16x256xf32, #tpu.memory_space<vmem>>, vector<1x16x128xf32>
    %6 = vector.shape_cast %5 : vector<1x16x128xf32> to vector<16x128xf32>
    %7 = arith.addf %4, %6 : vector<16x128xf32>
    %8 = arith.maximumf %4, %6 : vector<16x128xf32>
    %c0_5 = arith.constant 0 : index
    %c0_6 = arith.constant 0 : index
    %9 = vector.load %arg8[%c0_5, %c0_6] : memref<16x128xf32, #tpu.memory_space<vmem>>, vector<16x128xf32>
    %10 = arith.addf %9, %7 : vector<16x128xf32>
    %c0_7 = arith.constant 0 : index
    %c0_8 = arith.constant 0 : index
    %11 = vector.load %arg8[%c0_7, %c0_8] : memref<16x128xf32, #tpu.memory_space<vmem>>, vector<16x128xf32>
    tpu.vector_store %arg8[%c0_7, %c0_8], %10 {strides = array<i32>} : memref<16x128xf32, #tpu.memory_space<vmem>>, vector<16x128xf32>,
    %c0_9 = arith.constant 0 : index
    %c0_10 = arith.constant 0 : index
    %12 = vector.load %arg9[%c0_9, %c0_10] : memref<16x128xf32, #tpu.memory_space<vmem>>, vector<16x128xf32>
    %13 = arith.maximumf %12, %8 : vector<16x128xf32>
    %c0_11 = arith.constant 0 : index
    %c0_12 = arith.constant 0 : index
    %14 = vector.load %arg9[%c0_11, %c0_12] : memref<16x128xf32, #tpu.memory_space<vmem>>, vector<16x128xf32>
    tpu.vector_store %arg9[%c0_11, %c0_12], %13 {strides = array<i32>} : memref<16x128xf32, #tpu.memory_space<vmem>>, vector<16x128xf32>,
    %c0_i32_13 = arith.constant 0 : i32
    %15 = arith.cmpi eq, %arg1, %c0_i32_13 : i32
    %16 = arith.extui %15 : i1 to i32
    %c0_i32_14 = arith.constant 0 : i32
    %17 = arith.cmpi ne, %16, %c0_i32_14 : i32
    scf.if %17 {
      %c0_15 = arith.constant 0 : index
      %c0_16 = arith.constant 0 : index
      %18 = vector.load %arg8[%c0_15, %c0_16] : memref<16x128xf32, #tpu.memory_space<vmem>>, vector<16x128xf32>
      %cst = arith.constant dense<0.000000e+00> : vector<16xf32>
      %19 = vector.multi_reduction <add>, %18, %cst [1] : vector<16x128xf32> to vector<16xf32>
      %20 = vector.shape_cast %19 : vector<16xf32> to vector<16x1xf32>
      %cst_17 = arith.constant 3.906250e-03 : f32
      %21 = vector.broadcast %cst_17 : f32 to vector<16x1xf32>
      %22 = arith.mulf %20, %21 : vector<16x1xf32>
      %c0_18 = arith.constant 0 : index
      %c0_19 = arith.constant 0 : index
      %23 = vector.load %arg9[%c0_18, %c0_19] : memref<16x128xf32, #tpu.memory_space<vmem>>, vector<16x128xf32>
      %cst_20 = arith.constant dense<0xFF800000> : vector<16xf32>
      %24 = vector.multi_reduction <maximumf>, %23, %cst_20 [1] : vector<16x128xf32> to vector<16xf32>
      %25 = vector.shape_cast %24 : vector<16xf32> to vector<16x1xf32>
      %26 = tpu.iota {dimensions = array<i32: 1>} : vector<16x2xi32>
      %c0_i32_21 = arith.constant 0 : i32
      %27 = vector.broadcast %c0_i32_21 : i32 to vector<16x2xi32>
      %28 = arith.cmpi eq, %26, %27 : vector<16x2xi32>
      %29 = vector.shape_cast %22 : vector<16x1xf32> to vector<16x1xf32>
      %30 = vector.broadcast %29 : vector<16x1xf32> to vector<16x2xf32>
      %31 = vector.shape_cast %25 : vector<16x1xf32> to vector<16x1xf32>
      %32 = vector.broadcast %31 : vector<16x1xf32> to vector<16x2xf32>
      %33 = arith.select %28, %30, %32 : vector<16x2xi1>, vector<16x2xf32>
      %c0_22 = arith.constant 0 : index
      %c0_23 = arith.constant 0 : index
      %34 = vector.load %arg3[%c0_22, %c0_23] : memref<4x16xf32, #tpu.memory_space<vmem>>, vector<4x16xf32>
      %cst_24 = arith.constant dense<0.000000e+00> : vector<4x2xf32>
      %35 = tpu.matmul %34, %33, %cst_24 {dimension_numbers = #tpu.dot_dimension_numbers<[1], [0], [0], [1], [0, 0, 1, 1], [], []>} : vector<4x16xf32>, vector<16x2xf32>, vector<4x2xf32> -> vector<4x2xf32>
      %c0_25 = arith.constant 0 : index
      %c0_26 = arith.constant 0 : index
      %36 = vector.load %arg4[%c0_25, %c0_26] : memref<4x1xf32, #tpu.memory_space<vmem>>, vector<4x1xf32>
      %37 = vector.broadcast %36 : vector<4x1xf32> to vector<4x2xf32>
      %38 = arith.addf %35, %37 : vector<4x2xf32>
      %cst_27 = arith.constant 0.000000e+00 : f32
      %39 = vector.broadcast %cst_27 : f32 to vector<4x2xf32>
      %40 = arith.maximumf %38, %39 : vector<4x2xf32>
      %cst_28 = arith.constant dense<0.000000e+00> : vector<4xf32>
      %41 = vector.multi_reduction <add>, %40, %cst_28 [1] : vector<4x2xf32> to vector<4xf32>
      %42 = vector.shape_cast %41 : vector<4xf32> to vector<4x1xf32>
      %c0_29 = arith.constant 0 : index
      %c0_30 = arith.constant 0 : index
      %43 = vector.load %arg5[%c0_29, %c0_30] : memref<32x4xf32, #tpu.memory_space<vmem>>, vector<32x4xf32>
      %cst_31 = arith.constant dense<0.000000e+00> : vector<32x1xf32>
      %44 = tpu.matmul %43, %42, %cst_31 {dimension_numbers = #tpu.dot_dimension_numbers<[1], [0], [0], [1], [0, 0, 1, 1], [], []>} : vector<32x4xf32>, vector<4x1xf32>, vector<32x1xf32> -> vector<32x1xf32>
      %c0_32 = arith.constant 0 : index
      %c0_33 = arith.constant 0 : index
      %45 = vector.load %arg6[%c0_32, %c0_33] : memref<32x1xf32, #tpu.memory_space<vmem>>, vector<32x1xf32>
      %cst_34 = arith.constant 2.000000e+00 : f32
      %46 = vector.broadcast %cst_34 : f32 to vector<32x1xf32>
      %47 = arith.mulf %46, %45 : vector<32x1xf32>
      %48 = arith.addf %44, %47 : vector<32x1xf32>
      %49 = arith.negf %48 : vector<32x1xf32>
      %50 = math.exp %49 : vector<32x1xf32>
      %cst_35 = arith.constant 1.000000e+00 : f32
      %51 = vector.broadcast %cst_35 : f32 to vector<32x1xf32>
      %52 = arith.addf %51, %50 : vector<32x1xf32>
      %53 = arith.divf %51, %52 : vector<32x1xf32>
      %54 = vector.shape_cast %53 : vector<32x1xf32> to vector<1x32x1xf32>
      %c0_36 = arith.constant 0 : index
      %c0_37 = arith.constant 0 : index
      %c0_38 = arith.constant 0 : index
      %55 = vector.load %arg7[%c0_36, %c0_37, %c0_38] : memref<1x32x1xf32, #tpu.memory_space<vmem>>, vector<1x32x1xf32>
      tpu.vector_store %arg7[%c0_36, %c0_37, %c0_38], %54 {strides = array<i32>} : memref<1x32x1xf32, #tpu.memory_space<vmem>>, vector<1x32x1xf32>,
    } else {
    }
    return
  }
  func.func @transform_0(%arg0: i32, %arg1: i32) -> (i32, i32, i32) {
    %c0_i32 = arith.constant 0 : i32
    %c0_i32_0 = arith.constant 0 : i32
    return %arg0, %c0_i32, %arg1 : i32, i32, i32
  }
  func.func @transform_1(%arg0: i32, %arg1: i32) -> (i32, i32) {
    %c0_i32 = arith.constant 0 : i32
    %c0_i32_0 = arith.constant 0 : i32
    %c0_i32_1 = arith.constant 0 : i32
    return %c0_i32, %c0_i32_0 : i32, i32
  }
  func.func @transform_2(%arg0: i32, %arg1: i32) -> (i32, i32) {
    %c0_i32 = arith.constant 0 : i32
    %c0_i32_0 = arith.constant 0 : i32
    %c0_i32_1 = arith.constant 0 : i32
    return %c0_i32, %c0_i32_0 : i32, i32
  }
  func.func @transform_3(%arg0: i32, %arg1: i32) -> (i32, i32) {
    %c0_i32 = arith.constant 0 : i32
    %c0_i32_0 = arith.constant 0 : i32
    %c0_i32_1 = arith.constant 0 : i32
    return %c0_i32, %c0_i32_0 : i32, i32
  }
  func.func @transform_4(%arg0: i32, %arg1: i32) -> (i32, i32) {
    %c0_i32 = arith.constant 0 : i32
    %c0_i32_0 = arith.constant 0 : i32
    %c0_i32_1 = arith.constant 0 : i32
    return %c0_i32, %c0_i32_0 : i32, i32
  }
  func.func @transform_5(%arg0: i32, %arg1: i32) -> (i32, i32, i32) {
    %c0_i32 = arith.constant 0 : i32
    %c0_i32_0 = arith.constant 0 : i32
    %c0_i32_1 = arith.constant 0 : i32
    return %arg0, %c0_i32, %c0_i32_0 : i32, i32, i32
  }
}

</mosaic_0001>

<llo_original>
// kernel: tpu_custom_call.1
$region0: #{tpu_custom_call.1}
  #allocation0 [shape = 'u32[]', space=smem, size = 0x4, offset = 0x4, fixed_abs, tag = 'smem constant byte address 0x4 - core index']
  #allocation1 [shape = 'u32[144,128]{1,0:T(1,128)}', space=vmem, size = 0x12000, scoped, tag = 'internal scratch']
  #allocation2 [shape = 'f32[16,128]{1,0:T(8,128)}', space=vmem, size = 0x2000, scoped, tag = 'scratch operand']
  #allocation3 [shape = 'f32[16,128]{1,0:T(8,128)}', space=vmem, size = 0x2000, scoped, tag = 'scratch operand']
  %s0 = inlined_call_operand.vmem [shape: f32[2,16,256], index: 0, kind: input, shape index: {}]
  %s1 = inlined_call_operand.vmem [shape: f32[4,16], index: 1, kind: input, shape index: {}]
  %s2 = inlined_call_operand.vmem [shape: f32[4,1], index: 2, kind: input, shape index: {}]
  %s3 = inlined_call_operand.vmem [shape: f32[32,4], index: 3, kind: input, shape index: {}]
  %s4 = inlined_call_operand.vmem [shape: f32[32,1], index: 4, kind: input, shape index: {}]
  %s5 = inlined_call_operand.vmem [shape: f32[2,32,1], index: 5, kind: output, shape index: {}]
  %s6 = sld [smem:[#allocation0]]
  $region61: #{tpu_custom_call.1} parent=0
    _
  %s8 = ssub.s32 1, %s6
  %s9 = scalar_select 0, %s8, %s6
  loop: start=0, step=1, limit=4
  $region2: #{tpu_custom_call.1} parent=0 // loop_pre_header
    _
  $region3: #{tpu_custom_call.1} parent=0 // loop_header
    %s11 = sphi 0, %s15
    %p12 = scmp.ge.s32.totalorder %s11, 4
    %s18 = sphi 0, %s30
    %s19 = sphi 0, %s26
    %s20 = sphi 0, %s18
    %s21 = sphi 0, %s19
    %s22 = sphi 0, %s20
    %s23 = sphi 0, %s21
    %s35 = sphi 0, %s37
    %s38 = sphi 0, %s35
    %s39 = sphi 0, %s38
    %s55 = sphi 0, %s39
    %s59 = sphi 0, %s59
    %s61 = sphi 0, %s59
    %s62 = sphi 0, %s61
    %s76 = sphi 0, %s62
    %s80 = sphi 0, %s80
    %s82 = sphi 0, %s80
    %s83 = sphi 0, %s82
    %s97 = sphi 0, %s83
    %s101 = sphi 0, %s101
    %s103 = sphi 0, %s101
    %s104 = sphi 0, %s103
    %s118 = sphi 0, %s104
    %s122 = sphi 0, %s122
    %s124 = sphi 0, %s122
    %s125 = sphi 0, %s124
    %s139 = sphi 0, %s125
    %s145 = sphi 0, %s147
    %s148 = sphi 0, %s145
    %s149 = sphi 0, %s148
    %s165 = sphi 0, %s149
  $region4: #{tpu_custom_call.1} parent=0 // loop_header_branch
    %14 = sbr.rel (%p12) target = $region8
  $region5: #{tpu_custom_call.1} parent=0 // loop_body
    %s16 = ssub.s32 %s11, 1
    %s17 = ssub.s32 %s11, 2
    %s24 = sadd.s32 1, %s19
    %p25 = scmp.ge.s32.totalorder %s24, 1
    %s26 = scalar_select %p25, 0, %s24
    %s27 = sadd.s32 1, %s18
    %s28 = scalar_select %p25, %s27, %s18
    %p29 = scmp.ge.s32.totalorder %s28, 2
    %s30 = scalar_select %p29, 0, %s28
    %s31 = ssub.s32 %s18, %s30
    %s32 = ssub.s32 %s19, %s26
    %s33 = sor.u32 %s31, %s32
    %p34 = scmp.eq.s32.totalorder %s33, 0
    %s36 = sadd.s32 %s35, 1
    %s37 = scalar_select %p34, %s35, %s36
    %p40 = pneg %p34
    %p41 = scmp.eq.s32.totalorder %s11, 1
    %p42 = por %p40, %p41
    %p43 = scmp.ne.s32.totalorder %s35, %s38
    %p44 = scmp.eq.s32.totalorder %s11, 0
    %p45 = por %p43, %p44
    %p46 = scmp.ne.s32.totalorder %s35, %s38
    %p47 = scmp.eq.s32.totalorder %s16, 1
    %p48 = por %p46, %p47
    %p49 = scmp.ne.s32.totalorder %s38, %s39
    %p50 = scmp.eq.s32.totalorder %s16, 0
    %p51 = por %p49, %p50
    %p52 = scmp.ne.s32.totalorder %s38, %s39
    %p53 = scmp.eq.s32.totalorder %s17, 1
    %p54 = por %p52, %p53
    %p56 = scmp.ne.s32.totalorder %s39, %s55
    %p57 = scmp.eq.s32.totalorder %s17, 0
    %p58 = por %p56, %p57
    %s60 = sadd.s32 %s59, 1
    %p63 = scmp.eq.s32.totalorder %s11, 1
    %p64 = scmp.ne.s32.totalorder %s59, %s61
    %p65 = scmp.eq.s32.totalorder %s11, 0
    %p66 = por %p64, %p65
    %p67 = scmp.ne.s32.totalorder %s59, %s61
    %p68 = scmp.eq.s32.totalorder %s16, 1
    %p69 = por %p67, %p68
    %p70 = scmp.ne.s32.totalorder %s61, %s62
    %p71 = scmp.eq.s32.totalorder %s16, 0
    %p72 = por %p70, %p71
    %p73 = scmp.ne.s32.totalorder %s61, %s62
    %p74 = scmp.eq.s32.totalorder %s17, 1
    %p75 = por %p73, %p74
    %p77 = scmp.ne.s32.totalorder %s62, %s76
    %p78 = scmp.eq.s32.totalorder %s17, 0
    %p79 = por %p77, %p78
    %s81 = sadd.s32 %s80, 1
    %p84 = scmp.eq.s32.totalorder %s11, 1
    %p85 = scmp.ne.s32.totalorder %s80, %s82
    %p86 = scmp.eq.s32.totalorder %s11, 0
    %p87 = por %p85, %p86
    %p88 = scmp.ne.s32.totalorder %s80, %s82
    %p89 = scmp.eq.s32.totalorder %s16, 1
    %p90 = por %p88, %p89
    %p91 = scmp.ne.s32.totalorder %s82, %s83
    %p92 = scmp.eq.s32.totalorder %s16, 0
    %p93 = por %p91, %p92
    %p94 = scmp.ne.s32.totalorder %s82, %s83
    %p95 = scmp.eq.s32.totalorder %s17, 1
    %p96 = por %p94, %p95
    %p98 = scmp.ne.s32.totalorder %s83, %s97
    %p99 = scmp.eq.s32.totalorder %s17, 0
    %p100 = por %p98, %p99
    %s102 = sadd.s32 %s101, 1
    %p105 = scmp.eq.s32.totalorder %s11, 1
    %p106 = scmp.ne.s32.totalorder %s101, %s103
    %p107 = scmp.eq.s32.totalorder %s11, 0
    %p108 = por %p106, %p107
    %p109 = scmp.ne.s32.totalorder %s101, %s103
    %p110 = scmp.eq.s32.totalorder %s16, 1
    %p111 = por %p109, %p110
    %p112 = scmp.ne.s32.totalorder %s103, %s104
    %p113 = scmp.eq.s32.totalorder %s16, 0
    %p114 = por %p112, %p113
    %p115 = scmp.ne.s32.totalorder %s103, %s104
    %p116 = scmp.eq.s32.totalorder %s17, 1
    %p117 = por %p115, %p116
    %p119 = scmp.ne.s32.totalorder %s104, %s118
    %p120 = scmp.eq.s32.totalorder %s17, 0
    %p121 = por %p119, %p120
    %s123 = sadd.s32 %s122, 1
    %p126 = scmp.eq.s32.totalorder %s11, 1
    %p127 = scmp.ne.s32.totalorder %s122, %s124
    %p128 = scmp.eq.s32.totalorder %s11, 0
    %p129 = por %p127, %p128
    %p130 = scmp.ne.s32.totalorder %s122, %s124
    %p131 = scmp.eq.s32.totalorder %s16, 1
    %p132 = por %p130, %p131
    %p133 = scmp.ne.s32.totalorder %s124, %s125
    %p134 = scmp.eq.s32.totalorder %s16, 0
    %p135 = por %p133, %p134
    %p136 = scmp.ne.s32.totalorder %s124, %s125
    %p137 = scmp.eq.s32.totalorder %s17, 1
    %p138 = por %p136, %p137
    %p140 = scmp.ne.s32.totalorder %s125, %s139
    %p141 = scmp.eq.s32.totalorder %s17, 0
    %p142 = por %p140, %p141
    %s143 = ssub.s32 %s18, %s30
    %p144 = scmp.eq.s32.totalorder %s143, 0
    %s146 = sadd.s32 %s145, 1
    %s147 = scalar_select %p144, %s145, %s146
    %p150 = pneg %p144
    %p151 = scmp.eq.s32.totalorder %s11, 1
    %p152 = por %p150, %p151
    %p153 = scmp.ne.s32.totalorder %s145, %s148
    %p154 = scmp.eq.s32.totalorder %s11, 0
    %p155 = por %p153, %p154
    %p156 = scmp.ne.s32.totalorder %s145, %s148
    %p157 = scmp.eq.s32.totalorder %s16, 1
    %p158 = por %p156, %p157
    %p159 = scmp.ne.s32.totalorder %s148, %s149
    %p160 = scmp.eq.s32.totalorder %s16, 0
    %p161 = por %p159, %p160
    %p162 = scmp.ne.s32.totalorder %s148, %s149
    %p163 = scmp.eq.s32.totalorder %s17, 1
    %p164 = por %p162, %p163
    %p166 = scmp.ne.s32.totalorder %s149, %s165
    %p167 = scmp.eq.s32.totalorder %s17, 0
    %p168 = por %p166, %p167
    %p169 = scmp.le.s32.totalorder 1, %s11
    %p170 = scmp.lt.s32.totalorder %s11, 3
    %p171 = pnand %p169, %p170
    %p172 = pneg %p171
    // Predicated region
    $region9: #{tpu_custom_call.1} parent=5 // pred_check
      _
    $region10: #{tpu_custom_call.1} parent=5 // pred_check_branch
      %174 = sbr.rel (%p171) target = $region12
    $region11: #{tpu_custom_call.1} parent=5 // pred_region
      %s175 = ssub.s32 %s11, 1
      // Predicated region
      $region13: #{tpu_custom_call.1} parent=11 // pred_check
        %p176 = pneg %p72
      $region14: #{tpu_custom_call.1} parent=11 // pred_check_branch
        %178 = sbr.rel (%p176) target = $region16
      $region15: #{tpu_custom_call.1} parent=11 // pred_region
        _
      $region16: #{tpu_custom_call.1} parent=11 // pred_fallthru
        _
      // Predicated region
      $region17: #{tpu_custom_call.1} parent=11 // pred_check
        %p179 = pneg %p93
      $region18: #{tpu_custom_call.1} parent=11 // pred_check_branch
        %181 = sbr.rel (%p179) target = $region20
      $region19: #{tpu_custom_call.1} parent=11 // pred_region
        _
      $region20: #{tpu_custom_call.1} parent=11 // pred_fallthru
        _
      // Predicated region
      $region21: #{tpu_custom_call.1} parent=11 // pred_check
        %p182 = pneg %p114
      $region22: #{tpu_custom_call.1} parent=11 // pred_check_branch
        %184 = sbr.rel (%p182) target = $region24
      $region23: #{tpu_custom_call.1} parent=11 // pred_region
        _
      $region24: #{tpu_custom_call.1} parent=11 // pred_fallthru
        _
      // Predicated region
      $region25: #{tpu_custom_call.1} parent=11 // pred_check
        %p185 = pneg %p135
      $region26: #{tpu_custom_call.1} parent=11 // pred_check_branch
        %187 = sbr.rel (%p185) target = $region28
      $region27: #{tpu_custom_call.1} parent=11 // pred_region
        _
      $region28: #{tpu_custom_call.1} parent=11 // pred_fallthru
        _
    $region12: #{tpu_custom_call.1} parent=5 // pred_fallthru
      _
    %p188 = scmp.lt.s32.totalorder %s11, 2
    // Predicated region
    $region29: #{tpu_custom_call.1} parent=5 // pred_check
      %p189 = pneg %p188
    $region30: #{tpu_custom_call.1} parent=5 // pred_check_branch
      %191 = sbr.rel (%p189) target = $region32
    $region31: #{tpu_custom_call.1} parent=5 // pred_region
      // Predicated region
      $region33: #{tpu_custom_call.1} parent=31 // pred_check
        %p192 = pneg %p45
      $region34: #{tpu_custom_call.1} parent=31 // pred_check_branch
        %194 = sbr.rel (%p192) target = $region36
      $region35: #{tpu_custom_call.1} parent=31 // pred_region
        %s195 = smul.u32 2, %s19
        %p196 = scmp.lt.s32.totalorder %s18, 1
        %s197 = scalar_select %p196, %s18, 1
        %p198 = scmp.lt.s32.totalorder %s195, 1
        %s199 = scalar_select %p198, %s195, 1
        %s200 = smul.addr %s197, 4
        %s201 = sadd.s32 %s199, %s200
        %s202 = smul.addr %s201, 8
        %s203 = scalar_lea.vmem %s0, %s202
        %s204 = smul.u32 2, %s19
      $region36: #{tpu_custom_call.1} parent=31 // pred_fallthru
        _
    $region32: #{tpu_custom_call.1} parent=5 // pred_fallthru
      _
    %p205 = scmp.le.s32.totalorder 1, %s11
    %p206 = scmp.lt.s32.totalorder %s11, 3
    %p207 = pnand %p205, %p206
    %p208 = pneg %p207
    // Predicated region
    $region37: #{tpu_custom_call.1} parent=5 // pred_check
      _
    $region38: #{tpu_custom_call.1} parent=5 // pred_check_branch
      %210 = sbr.rel (%p207) target = $region40
    $region39: #{tpu_custom_call.1} parent=5 // pred_region
      %s211 = ssub.s32 %s11, 1
      %s212 = smul.u32 2, %s21
      %p213 = scmp.lt.s32.totalorder %s20, 1
      %s214 = scalar_select %p213, %s20, 1
      %p215 = scmp.lt.s32.totalorder %s212, 1
      %s216 = scalar_select %p215, %s212, 1
      %s217 = smul.addr %s214, 4
      %s218 = sadd.s32 %s216, %s217
      %s219 = smul.addr %s218, 8
      %s220 = scalar_lea.vmem %s0, %s219
      %p221 = pneg %p51
      %p222 = pneg %p48
      %p223 = pneg %p72
      %p224 = pneg %p69
      %p225 = pneg %p93
      %p226 = pneg %p90
      %p227 = pneg %p114
      %p228 = pneg %p111
      %p229 = pneg %p135
      %p230 = pneg %p132
      %p231 = pneg %p161
      %p232 = pneg %p158
      %p233 = scmp.lt.s32.totalorder %s20, 1
      %s234 = scalar_select %p233, %s20, 1
      %s235 = smul.addr %s234, 4
      %s236 = smul.addr %s235, 8
      %s237 = scalar_lea.vmem %s5, %s236
      %s238 = smul.u32 2, %s21
      %p239 = scmp.lt.s32.totalorder %s20, 1
      %s240 = scalar_select %p239, %s20, 1
      %p241 = scmp.lt.s32.totalorder %s238, 1
      %s242 = scalar_select %p241, %s238, 1
      %s243 = smul.addr %s240, 4
      %s244 = sadd.s32 %s242, %s243
      %s245 = smul.addr %s244, 8
      %s246 = scalar_lea.vmem %s0, %s245
      %s247 = smul.u32 2, %s21
      %p248 = scmp.lt.s32.totalorder %s20, 1
      %s249 = scalar_select %p248, %s20, 1
      %s250 = smul.addr %s249, 4
      %s251 = smul.addr %s250, 8
      %s252 = scalar_lea.vmem %s5, %s251
      %p253 = scmp.eq.s32.totalorder %s21, 0
      // Predicated region
      $region41: #{tpu_custom_call.1} parent=39 // pred_check
        %p254 = pneg %p253
      $region42: #{tpu_custom_call.1} parent=39 // pred_check_branch
        %256 = sbr.rel (%p254) target = $region44
      $region43: #{tpu_custom_call.1} parent=39 // pred_region
        %257 = vst [vmem:[#allocation2] sm:$0xff] 0.0
        %258 = vst [vmem:[#allocation2 + $0x8] sm:$0xff] 0.0
        %259 = vst [vmem:[#allocation3] sm:$0xff] -inf
        %260 = vst [vmem:[#allocation3 + $0x8] sm:$0xff] -inf
      $region44: #{tpu_custom_call.1} parent=39 // pred_fallthru
        _
      %v261 = vld [vmem:[%s246] sm:$0xff]
      %v262 = vld [vmem:[%s246 + $0x10] sm:$0xff]
      %v263 = vld [vmem:[%s246 + $0x8] sm:$0xff]
      %v264 = vld [vmem:[%s246 + $0x18] sm:$0xff]
      %v265 = vadd.f32 %v261, %v263
      %v266 = vadd.f32 %v262, %v264
      %v267 = vmax.f32 %v261, %v263
      %v268 = vmax.f32 %v262, %v264
      %v269 = vld [vmem:[#allocation2] sm:$0xff]
      %v270 = vld [vmem:[#allocation2 + $0x8] sm:$0xff]
      %v271 = vadd.f32 %v269, %v265
      %v272 = vadd.f32 %v270, %v266
      %273 = vst [vmem:[#allocation2] sm:$0xff] %v271
      %274 = vst [vmem:[#allocation2 + $0x8] sm:$0xff] %v272
      %v275 = vld [vmem:[#allocation3] sm:$0xff]
      %v276 = vld [vmem:[#allocation3 + $0x8] sm:$0xff]
      %v277 = vmax.f32 %v275, %v267
      %v278 = vmax.f32 %v276, %v268
      %279 = vst [vmem:[#allocation3] sm:$0xff] %v277
      %280 = vst [vmem:[#allocation3 + $0x8] sm:$0xff] %v278
      // Predicated region
      $region45: #{tpu_custom_call.1} parent=39 // pred_check
        %p281 = pneg %p253
      $region46: #{tpu_custom_call.1} parent=39 // pred_check_branch
        %283 = sbr.rel (%p281) target = $region48
      $region47: #{tpu_custom_call.1} parent=39 // pred_region
        %v284 = vld [vmem:[#allocation2] sm:$0xff]
        %v285 = vld [vmem:[#allocation2 + $0x8] sm:$0xff]
        %286 = vadd.xlane.f32.xlu0 %v284
        %v287 = vpop.xlane.xlu0 %286
        %288 = vadd.xlane.f32.xlu0 %v285
        %v289 = vpop.xlane.xlu0 %288
        %v290 = vmul.f32 %v287, 0.00390625
        %v291 = vmul.f32 %v289, 0.00390625
        %v292 = vld [vmem:[#allocation3] sm:$0xff]
        %v293 = vld [vmem:[#allocation3 + $0x8] sm:$0xff]
        %294 = vmax.xlane.f32.xlu0 %v292
        %v295 = vpop.xlane.xlu0 %294
        %296 = vmax.xlane.f32.xlu0 %v293
        %v297 = vpop.xlane.xlu0 %296
        %v298 = vlaneseq
        %v299 = vand.u32 %v298, 127
        %vm300 = vcmp.eq.s32.totalorder %v299, 0
        %v301 = vsel %vm300, %v290, %v295
        %v302 = vsel %vm300, %v291, %v297
        %v303 = vld [vmem:[%s1] sm:$0xf]
        %v304 = vld [vmem:[%s2] sm:$0xf]
        %306 = vset.pattern.permute.xlu0 0
        %307 = vperm.xlu0 %306, %v304
        %v308 = vpop.permute.xlu0 %307
        %vm310 = vcmask 130048
        %v312 = vsel %vm310, %v303, 0
        %314 = vmatprep.subr.mxu0 0.0
        %315 = vmatpush1.msra.mxu0 %v301
        %316 = vmatprep.subr.mxu0 0.0
        %317 = vmatpush1.msra.mxu0 %v302
        %318 = vmatprep.subr.mxu0 0.0
        %319 = vmatpush1.msra.mxu0 0.0
        %320 = vmatprep.subr.mxu0 0.0
        %321 = vmatpush1.msra.mxu0 0.0
        %322 = vmatprep.subr.mxu0 0.0
        %323 = vmatpush1.msra.mxu0 0.0
        %324 = vmatprep.subr.mxu0 0.0
        %325 = vmatpush1.msra.mxu0 0.0
        %326 = vmatprep.subr.mxu0 0.0
        %327 = vmatpush1.msra.mxu0 0.0
        %328 = vmatprep.subr.mxu0 0.0
        %329 = vmatpush1.msra.mxu0 0.0
        %330 = vmatprep.subr.mxu0 0.0
        %331 = vmatpush1.msra.mxu0 0.0
        %332 = vmatprep.subr.mxu0 0.0
        %333 = vmatpush1.msra.mxu0 0.0
        %334 = vmatprep.subr.mxu0 0.0
        %335 = vmatpush1.msra.mxu0 0.0
        %336 = vmatprep.subr.mxu0 0.0
        %337 = vmatpush1.msra.mxu0 0.0
        %338 = vmatprep.subr.mxu0 0.0
        %339 = vmatpush1.msra.mxu0 0.0
        %340 = vmatprep.subr.mxu0 0.0
        %341 = vmatpush1.msra.mxu0 0.0
        %342 = vmatprep.subr.mxu0 0.0
        %343 = vmatpush1.msra.mxu0 0.0
        %344 = vmatprep.subr.mxu0 0.0
        %345 = vmatpush1.msra.mxu0 0.0
        %346 = vmatprep.subr.mxu0 0.0
        %347 = vmatpush1.msra.mxu0 0.0
        %348 = vmatprep.subr.mxu0 0.0
        %349 = vmatpush1.msra.mxu0 0.0
        %350 = vmatprep.subr.mxu0 0.0
        %351 = vmatpush1.msra.mxu0 0.0
        %352 = vmatprep.subr.mxu0 0.0
        %353 = vmatpush1.msra.mxu0 0.0
        %354 = vmatprep.subr.mxu0 0.0
        %355 = vmatpush1.msra.mxu0 0.0
        %356 = vmatprep.subr.mxu0 0.0
        %357 = vmatpush1.msra.mxu0 0.0
        %358 = vmatprep.subr.mxu0 0.0
        %359 = vmatpush1.msra.mxu0 0.0
        %360 = vmatprep.subr.mxu0 0.0
        %361 = vmatpush1.msra.mxu0 0.0
        %362 = vmatprep.subr.mxu0 0.0
        %363 = vmatpush1.msra.mxu0 0.0
        %364 = vmatprep.subr.mxu0 0.0
        %365 = vmatpush1.msra.mxu0 0.0
        %366 = vmatprep.subr.mxu0 0.0
        %367 = vmatpush1.msra.mxu0 0.0
        %368 = vmatprep.subr.mxu0 0.0
        %369 = vmatpush1.msra.mxu0 0.0
        %370 = vmatprep.subr.mxu0 0.0
        %371 = vmatpush1.msra.mxu0 0.0
        %372 = vmatprep.subr.mxu0 0.0
        %373 = vmatpush1.msra.mxu0 0.0
        %374 = vmatprep.subr.mxu0 0.0
        %375 = vmatpush1.msra.mxu0 0.0
        %376 = vmatprep.subr.mxu0 0.0
        %377 = vmatpush1.msra.mxu0 0.0
        %378 = vmatprep.mubr.f32.mxu0 0.0
        %379 = vmatmul.mubr.f32.gmra.mrb[0].mxu0 %v312
        %v380 = vpop.f32.mrb[0].mxu0
        %v381 = vadd.f32 %v308, %v380
        %v382 = vpop.f32.mrb[0].mxu0
        %383 = vdwg.mxu0
        %v384 = vmax.f32 %v381, 0.0
        %vm385 = vcmask 11264
        %v386 = vsel %vm385, %v384, 0.0
        %387 = vadd.xlane.f32.xlu0 %v386
        %v388 = vpop.xlane.xlu0 %387
        %v389 = vld [vmem:[%s3] sm:$0xff]
        %v390 = vld [vmem:[%s3 + $0x8] sm:$0xff]
        %v391 = vld [vmem:[%s3 + $0x10] sm:$0xff]
        %v392 = vld [vmem:[%s3 + $0x18] sm:$0xff]
        %v393 = vld [vmem:[%s4] sm:$0xff]
        %v394 = vld [vmem:[%s4 + $0x8] sm:$0xff]
        %v395 = vld [vmem:[%s4 + $0x10] sm:$0xff]
        %v396 = vld [vmem:[%s4 + $0x18] sm:$0xff]
        %v397 = vmul.f32 %v393, 2.0
        %v398 = vmul.f32 %v394, 2.0
        %v399 = vmul.f32 %v395, 2.0
        %v400 = vmul.f32 %v396, 2.0
        %vm401 = vcmask 31744
        %v403 = vsel %vm401, %v389, 0
        %v406 = vsel %vm401, %v390, 0
        %v409 = vsel %vm401, %v391, 0
        %v412 = vsel %vm401, %v392, 0
        %vm414 = vcmask 1043456
        %v416 = vsel %vm414, %v388, 0
        %418 = vmatprep.subr.mxu0 0.0
        %419 = vmatpush1.msra.mxu0 %v416
        %420 = vmatprep.subr.mxu0 0.0
        %421 = vmatpush1.msra.mxu0 0.0
        %422 = vmatprep.subr.mxu0 0.0
        %423 = vmatpush1.msra.mxu0 0.0
        %424 = vmatprep.subr.mxu0 0.0
        %425 = vmatpush1.msra.mxu0 0.0
        %426 = vmatprep.subr.mxu0 0.0
        %427 = vmatpush1.msra.mxu0 0.0
        %428 = vmatprep.subr.mxu0 0.0
        %429 = vmatpush1.msra.mxu0 0.0
        %430 = vmatprep.subr.mxu0 0.0
        %431 = vmatpush1.msra.mxu0 0.0
        %432 = vmatprep.subr.mxu0 0.0
        %433 = vmatpush1.msra.mxu0 0.0
        %434 = vmatprep.subr.mxu0 0.0
        %435 = vmatpush1.msra.mxu0 0.0
        %436 = vmatprep.subr.mxu0 0.0
        %437 = vmatpush1.msra.mxu0 0.0
        %438 = vmatprep.subr.mxu0 0.0
        %439 = vmatpush1.msra.mxu0 0.0
        %440 = vmatprep.subr.mxu0 0.0
        %441 = vmatpush1.msra.mxu0 0.0
        %442 = vmatprep.subr.mxu0 0.0
        %443 = vmatpush1.msra.mxu0 0.0
        %444 = vmatprep.subr.mxu0 0.0
        %445 = vmatpush1.msra.mxu0 0.0
        %446 = vmatprep.subr.mxu0 0.0
        %447 = vmatpush1.msra.mxu0 0.0
        %448 = vmatprep.subr.mxu0 0.0
        %449 = vmatpush1.msra.mxu0 0.0
        %450 = vmatprep.subr.mxu0 0.0
        %451 = vmatpush1.msra.mxu0 0.0
        %452 = vmatprep.subr.mxu0 0.0
        %453 = vmatpush1.msra.mxu0 0.0
        %454 = vmatprep.subr.mxu0 0.0
        %455 = vmatpush1.msra.mxu0 0.0
        %456 = vmatprep.subr.mxu0 0.0
        %457 = vmatpush1.msra.mxu0 0.0
        %458 = vmatprep.subr.mxu0 0.0
        %459 = vmatpush1.msra.mxu0 0.0
        %460 = vmatprep.subr.mxu0 0.0
        %461 = vmatpush1.msra.mxu0 0.0
        %462 = vmatprep.subr.mxu0 0.0
        %463 = vmatpush1.msra.mxu0 0.0
        %464 = vmatprep.subr.mxu0 0.0
        %465 = vmatpush1.msra.mxu0 0.0
        %466 = vmatprep.subr.mxu0 0.0
        %467 = vmatpush1.msra.mxu0 0.0
        %468 = vmatprep.subr.mxu0 0.0
        %469 = vmatpush1.msra.mxu0 0.0
        %470 = vmatprep.subr.mxu0 0.0
        %471 = vmatpush1.msra.mxu0 0.0
        %472 = vmatprep.subr.mxu0 0.0
        %473 = vmatpush1.msra.mxu0 0.0
        %474 = vmatprep.subr.mxu0 0.0
        %475 = vmatpush1.msra.mxu0 0.0
        %476 = vmatprep.subr.mxu0 0.0
        %477 = vmatpush1.msra.mxu0 0.0
        %478 = vmatprep.subr.mxu0 0.0
        %479 = vmatpush1.msra.mxu0 0.0
        %480 = vmatprep.subr.mxu0 0.0
        %481 = vmatpush1.msra.mxu0 0.0
        %482 = vmatprep.mubr.f32.mxu0 0.0
        %483 = vmatmul.mubr.f32.gmra.mrb[0].mxu0 %v403
        %v484 = vpop.f32.mrb[0].mxu0
        %v485 = vadd.f32 %v397, %v484
        %v486 = vpop.f32.mrb[0].mxu0
        %487 = vmatprep.mubr.f32.mxu0 0.0
        %488 = vmatmul.mubr.f32.gmra.mrb[0].mxu0 %v406
        %v489 = vpop.f32.mrb[0].mxu0
        %v490 = vadd.f32 %v398, %v489
        %v491 = vpop.f32.mrb[0].mxu0
        %492 = vmatprep.mubr.f32.mxu0 0.0
        %493 = vmatmul.mubr.f32.gmra.mrb[0].mxu0 %v409
        %v494 = vpop.f32.mrb[0].mxu0
        %v495 = vadd.f32 %v399, %v494
        %v496 = vpop.f32.mrb[0].mxu0
        %497 = vmatprep.mubr.f32.mxu0 0.0
        %498 = vmatmul.mubr.f32.gmra.mrb[0].mxu0 %v412
        %v499 = vpop.f32.mrb[0].mxu0
        %v500 = vadd.f32 %v400, %v499
        %v501 = vpop.f32.mrb[0].mxu0
        %502 = vdwg.mxu0
        %v503 = vxor.u32 %v485, 2147483648
        %v504 = vxor.u32 %v490, 2147483648
        %v505 = vxor.u32 %v495, 2147483648
        %v506 = vxor.u32 %v500, 2147483648
        %v507 = vmul.f32 %v503, 1.442695
        %v508 = vpow.pop %v507
        %v509 = vmul.f32 %v504, 1.442695
        %v510 = vpow.pop %v509
        %v511 = vmul.f32 %v505, 1.442695
        %v512 = vpow.pop %v511
        %v513 = vmul.f32 %v506, 1.442695
        %v514 = vpow.pop %v513
        %v515 = vadd.f32 %v508, 1.0
        %v516 = vadd.f32 %v510, 1.0
        %v517 = vadd.f32 %v512, 1.0
        %v518 = vadd.f32 %v514, 1.0
        %v519 = vrcp.pop %v515
        %v520 = vmul.f32 1.0, %v519
        %v521 = vrcp.pop %v516
        %v522 = vmul.f32 1.0, %v521
        %v523 = vrcp.pop %v517
        %v524 = vmul.f32 1.0, %v523
        %v525 = vrcp.pop %v518
        %v526 = vmul.f32 1.0, %v525
        %vm527 = vcmask 7168
        %528 = vst.msk [vmem:[%s252] sm:$0xff] %vm527, %v520
        %529 = vst.msk [vmem:[%s252 + $0x8] sm:$0xff] %vm527, %v522
        %530 = vst.msk [vmem:[%s252 + $0x10] sm:$0xff] %vm527, %v524
        %531 = vst.msk [vmem:[%s252 + $0x18] sm:$0xff] %vm527, %v526
      $region48: #{tpu_custom_call.1} parent=39 // pred_fallthru
        _
      %p532 = scmp.lt.s32.totalorder %s20, 1
      %s533 = scalar_select %p532, %s20, 1
      %s534 = smul.addr %s533, 4
      %s535 = smul.addr %s534, 8
      %s536 = scalar_lea.vmem %s5, %s535
      // Predicated region
      $region49: #{tpu_custom_call.1} parent=39 // pred_check
        %p537 = pneg %p158
      $region50: #{tpu_custom_call.1} parent=39 // pred_check_branch
        %539 = sbr.rel (%p537) target = $region52
      $region51: #{tpu_custom_call.1} parent=39 // pred_region
        _
      $region52: #{tpu_custom_call.1} parent=39 // pred_fallthru
        _
    $region40: #{tpu_custom_call.1} parent=5 // pred_fallthru
      _
    %p540 = scmp.le.s32.totalorder 2, %s11
    // Predicated region
    $region53: #{tpu_custom_call.1} parent=5 // pred_check
      %p541 = pneg %p540
    $region54: #{tpu_custom_call.1} parent=5 // pred_check_branch
      %543 = sbr.rel (%p541) target = $region56
    $region55: #{tpu_custom_call.1} parent=5 // pred_region
      %s544 = ssub.s32 %s11, 2
      // Predicated region
      $region57: #{tpu_custom_call.1} parent=55 // pred_check
        %p545 = pneg %p164
      $region58: #{tpu_custom_call.1} parent=55 // pred_check_branch
        %547 = sbr.rel (%p545) target = $region60
      $region59: #{tpu_custom_call.1} parent=55 // pred_region
        %p548 = scmp.lt.s32.totalorder %s22, 1
        %s549 = scalar_select %p548, %s22, 1
        %s550 = smul.addr %s549, 4
        %s551 = smul.addr %s550, 8
        %s552 = scalar_lea.vmem %s5, %s551
      $region60: #{tpu_custom_call.1} parent=55 // pred_fallthru
        _
    $region56: #{tpu_custom_call.1} parent=5 // pred_fallthru
      _
  $region6: #{tpu_custom_call.1} parent=0 // loop_footer
    %s15 = sadd.s32 1, %s11
  $region7: #{tpu_custom_call.1} parent=0 // loop_footer_branch
    %10 = sbr.rel target = $region3
  $region8: #{tpu_custom_call.1} parent=0 // loop_exit
    _

</llo_original>
